<compile_context>
chip_gen: v7x
topology: tpu7x:2x2x1
jax: 0.10.0
libtpu: 0.0.40
codegen_flags: <defaults>
</compile_context>

<pallas_src>
import functools

import jax
import jax.numpy as jnp
from jax import lax
from jax.experimental import pallas as pl
from jax.experimental.pallas import tpu as pltpu


def _sublayer_connection_kernel(seed_ref, x_ref, gamma_ref, beta_ref,
                                w_ref, b_ref, o_ref, normed_ref, *,
                                dropout_p, eps, tm, tn, d_model):
    j = pl.program_id(1)

    # --- LayerNorm(x) once per row tile (j == 0); cache bf16 LHS in scratch.
    #     Annotated-transformer flavour: unbiased std (D-1), eps added to std.
    @pl.when(j == 0)
    def _():
        x = x_ref[...].astype(jnp.float32)                    # (tm, D)
        s = jnp.sum(x, axis=-1, keepdims=True)                # single pass:
        sq = jnp.sum(x * x, axis=-1, keepdims=True)           # sum & sum-of-squares
        mean = s * (1.0 / d_model)
        var = jnp.maximum((sq - s * mean) * (1.0 / (d_model - 1)), 0.0)
        std = jnp.sqrt(var)
        inv = pl.reciprocal(std + eps, approx=True)           # EUP slot, not VALU
        normed = gamma_ref[...] * ((x - mean) * inv) + beta_ref[...]
        normed_ref[...] = normed.astype(jnp.bfloat16)

    # --- sublayer(norm(x)) for this column block: (tm, D) x (D, tn), MXU,
    #     bf16 inputs, f32 accumulation.
    y = jnp.dot(normed_ref[...], w_ref[...],
                preferred_element_type=jnp.float32)
    y = y + b_ref[...]

    # --- inverted dropout via a short stateless integer hash of the global
    #     element index (VPU integer ops only; deterministic per seed,
    #     tile-size invariant).
    if dropout_p > 0.0:
        seed = seed_ref[0].astype(jnp.uint32)
        row = (lax.broadcasted_iota(jnp.uint32, y.shape, 0)
               + (pl.program_id(0) * tm).astype(jnp.uint32))
        col = (lax.broadcasted_iota(jnp.uint32, y.shape, 1)
               + (j * tn).astype(jnp.uint32))
        h = (row * jnp.uint32(d_model) + col) * jnp.uint32(0x9E3779B9)
        h = h ^ (seed * jnp.uint32(0x85EBCA6B))
        h = h ^ (h >> 16)
        h = h * jnp.uint32(0xC2B2AE35)
        h = h ^ (h >> 15)
        threshold = jnp.uint32(min(int(round(dropout_p * (2 ** 32))), 2 ** 32 - 1))
        keep = h >= threshold                                  # P(keep) = 1 - p
        y = jnp.where(keep, y * (1.0 / (1.0 - dropout_p)), 0.0)

    # --- residual: re-read only this (tm, tn) slice of x at store time
    #     (no (tm, D) f32 live range across the matmul).
    col0 = pl.multiple_of(j * tn, tn)
    x_slice = x_ref[:, pl.ds(col0, tn)].astype(jnp.float32)
    o_ref[...] = (x_slice + y).astype(o_ref.dtype)


def _pick_tn(d_model, tn_max):
    """Largest 128-multiple <= tn_max that divides D; else a single N block."""
    if d_model % 128 != 0:
        return d_model
    tn = max(128, (min(int(tn_max), d_model) // 128) * 128)
    while d_model % tn != 0:
        tn -= 128
    return tn


def _default_vmem_limit(tm, tn, d_model, x_itemsize, out_itemsize):
    xblk = 2 * tm * d_model * x_itemsize        # double-buffered x row tile
    oblk = 2 * tm * tn * out_itemsize           # double-buffered out tile
    wblk = 2 * d_model * tn * 2                 # double-buffered bf16 weight tile
    consts = 2 * 3 * d_model * 4                # gamma / beta / bias
    scratch = tm * d_model * 2                  # cached bf16 normed LHS
    interm = 4 * tm * d_model * 4               # f32 LayerNorm intermediates headroom
    budget = int((xblk + oblk + wblk + consts + scratch + interm) * 1.5) + (4 << 20)
    return max(32 << 20, min(budget, 64 << 20))


def sublayer_connection(x, gamma, beta, w, b, seed, *,
                        dropout_p=0.1, eps=1e-6, tm=256, tn=512,
                        vmem_limit_bytes=None):
    """x: (B, S, D) f32 or bf16.  gamma/beta/b: (D,).  w: (D, D).  seed: int."""
    B, S, D = x.shape
    M = B * S
    x2 = x.reshape(M, D)

    # Row tile: big enough to feed the MXU / amortize per-step overhead,
    # multiple of 16 (bf16 sublane packing) unless it covers all rows.
    tm_eff = min(int(tm), M)
    if tm_eff != M:
        tm_eff = max(16, (tm_eff // 16) * 16)

    # Output-column tile: 128-multiple that divides D (lane-dense stores,
    # no OOB slice on the residual read).
    tn_eff = _pick_tn(D, tn)

    # Weight lives in bf16: half the DMA / resident VMEM, full MXU rate.
    w_bf16 = w.astype(jnp.bfloat16)

    if vmem_limit_bytes is None:
        vmem_limit_bytes = _default_vmem_limit(
            tm_eff, tn_eff, D, x.dtype.itemsize, x.dtype.itemsize)

    kernel = functools.partial(
        _sublayer_connection_kernel,
        dropout_p=float(dropout_p), eps=float(eps),
        tm=tm_eff, tn=tn_eff, d_model=D)

    out = pl.pallas_call(
        kernel,
        out_shape=jax.ShapeDtypeStruct((M, D), x.dtype),
        grid_spec=pltpu.PrefetchScalarGridSpec(
            num_scalar_prefetch=1,
            grid=(pl.cdiv(M, tm_eff), pl.cdiv(D, tn_eff)),
            in_specs=[
                # x row tile: independent of j -> stays resident across N blocks.
                pl.BlockSpec((tm_eff, D), lambda i, j, seed: (i, 0)),
                pl.BlockSpec((1, D),      lambda i, j, seed: (0, 0)),   # gamma
                pl.BlockSpec((1, D),      lambda i, j, seed: (0, 0)),   # beta
                pl.BlockSpec((D, tn_eff), lambda i, j, seed: (0, j)),   # weight column block
                pl.BlockSpec((1, tn_eff), lambda i, j, seed: (0, j)),   # bias column block
            ],
            out_specs=pl.BlockSpec((tm_eff, tn_eff), lambda i, j, seed: (i, j)),
            scratch_shapes=[pltpu.VMEM((tm_eff, D), jnp.bfloat16)],     # cached normed LHS
        ),
        compiler_params=pltpu.CompilerParams(
            dimension_semantics=("parallel", "arbitrary"),   # rows across cores; N sequential
            vmem_limit_bytes=int(vmem_limit_bytes)),
    )(jnp.array([seed], dtype=jnp.int32),
      x2,
      gamma.reshape(1, D).astype(jnp.float32),
      beta.reshape(1, D).astype(jnp.float32),
      w_bf16,
      b.reshape(1, D).astype(jnp.float32))

    return out.reshape(B, S, D)


def reference_no_dropout(x, gamma, beta, w, b, eps=1e-6):
    """Pure-JAX reference matching the kernel's bf16 matmul path (no dropout)."""
    xf = x.astype(jnp.float32)
    D = xf.shape[-1]
    mean = jnp.mean(xf, axis=-1, keepdims=True)
    centered = xf - mean
    var = jnp.sum(centered * centered, axis=-1, keepdims=True) / (D - 1)
    std = jnp.sqrt(var)
    normed = gamma * centered / (std + eps) + beta
    y = jnp.dot(normed.astype(jnp.bfloat16), w.astype(jnp.bfloat16),
                preferred_element_type=jnp.float32) + b
    return (xf + y).astype(x.dtype)


if __name__ == "__main__":
    # Small but lane-friendly demo shapes (D a multiple of 128; tm/tn chosen
    # so both grid axes have 2 steps and the cached-LHS reuse is exercised).
    B, S, D = 2, 16, 256
    key = jax.random.PRNGKey(0)
    kx, kw, kg, kb = jax.random.split(key, 4)

    x = jax.random.normal(kx, (B, S, D), dtype=jnp.float32)
    gamma = 1.0 + 0.1 * jax.random.normal(kg, (D,), dtype=jnp.float32)  # LayerNorm a_2
    beta = 0.1 * jax.random.normal(kb, (D,), dtype=jnp.float32)         # LayerNorm b_2
    w = jax.random.normal(kw, (D, D), dtype=jnp.float32) * (1.0 / jnp.sqrt(D))
    b = jnp.zeros((D,), dtype=jnp.float32)

    # Deterministic path (dropout off): compare against the pure-JAX reference.
    out_nodrop = sublayer_connection(x, gamma, beta, w, b, seed=0,
                                     dropout_p=0.0, tm=16, tn=128)
    out_nodrop = jax.block_until_ready(out_nodrop)
    ref = reference_no_dropout(x, gamma, beta, w, b)
    assert out_nodrop.shape == (B, S, D)
    assert jnp.allclose(out_nodrop, ref, atol=3e-2, rtol=3e-2), "mismatch vs reference"

    # Full path with dropout active (stateless, deterministic given seed).
    out = sublayer_connection(x, gamma, beta, w, b, seed=1234,
                              dropout_p=0.1, tm=16, tn=128)
    out = jax.block_until_ready(out)
    assert out.shape == (B, S, D)
    assert bool(jnp.all(jnp.isfinite(out)))

    print("KERNEL_OK")
</pallas_src>

<mosaic_0001>
module attributes {stable_mosaic.version = 11 : i64} {
  func.func @_sublayer_connection_kernel(%arg0: i32, %arg1: i32, %arg2: memref<1xi32, #tpu.memory_space<smem>>, %arg3: memref<16x256xf32, #tpu.memory_space<vmem>>, %arg4: memref<1x256xf32, #tpu.memory_space<vmem>>, %arg5: memref<1x256xf32, #tpu.memory_space<vmem>>, %arg6: memref<256x128xbf16, #tpu.memory_space<vmem>>, %arg7: memref<1x128xf32, #tpu.memory_space<vmem>>, %arg8: memref<16x128xf32, #tpu.memory_space<vmem>>, %arg9: memref<16x256xbf16, #tpu.memory_space<vmem>>) attributes {dimension_semantics = [#tpu.dimension_semantics<parallel>, #tpu.dimension_semantics<arbitrary>], iteration_bounds = array<i64: 2, 2>, scalar_prefetch = 1 : i64, scratch_operands = 1 : i64, tpu.core_type = #tpu.core_type<tc>, window_params = [{transform_indices = @transform_0, window_bounds = array<i64: 16, 256>}, {pipeline_mode = #tpu.pipeline_mode<synchronous>, transform_indices = @transform_1, window_bounds = array<i64: 1, 256>}, {pipeline_mode = #tpu.pipeline_mode<synchronous>, transform_indices = @transform_2, window_bounds = array<i64: 1, 256>}, {transform_indices = @transform_3, window_bounds = array<i64: 256, 128>}, {transform_indices = @transform_4, window_bounds = array<i64: 1, 128>}, {transform_indices = @transform_5, window_bounds = array<i64: 16, 128>}]} {
    %c0_i32 = arith.constant 0 : i32
    %0 = arith.cmpi eq, %arg1, %c0_i32 : i32
    %1 = arith.extui %0 : i1 to i32
    %c0_i32_0 = arith.constant 0 : i32
    %2 = arith.cmpi ne, %1, %c0_i32_0 : i32
    scf.if %2 {
      %c0_9 = arith.constant 0 : index
      %c0_10 = arith.constant 0 : index
      %15 = vector.load %arg3[%c0_9, %c0_10] : memref<16x256xf32, #tpu.memory_space<vmem>>, vector<16x256xf32>
      %cst_11 = arith.constant dense<0.000000e+00> : vector<16xf32>
      %16 = vector.multi_reduction <add>, %15, %cst_11 [1] : vector<16x256xf32> to vector<16xf32>
      %17 = vector.shape_cast %16 : vector<16xf32> to vector<16x1xf32>
      %18 = arith.mulf %15, %15 : vector<16x256xf32>
      %cst_12 = arith.constant dense<0.000000e+00> : vector<16xf32>
      %19 = vector.multi_reduction <add>, %18, %cst_12 [1] : vector<16x256xf32> to vector<16xf32>
      %20 = vector.shape_cast %19 : vector<16xf32> to vector<16x1xf32>
      %cst_13 = arith.constant 3.906250e-03 : f32
      %21 = vector.broadcast %cst_13 : f32 to vector<16x1xf32>
      %22 = arith.mulf %17, %21 : vector<16x1xf32>
      %23 = arith.mulf %17, %22 : vector<16x1xf32>
      %24 = arith.subf %20, %23 : vector<16x1xf32>
      %cst_14 = arith.constant 0.00392156886 : f32
      %25 = vector.broadcast %cst_14 : f32 to vector<16x1xf32>
      %26 = arith.mulf %24, %25 : vector<16x1xf32>
      %cst_15 = arith.constant 0.000000e+00 : f32
      %27 = vector.broadcast %cst_15 : f32 to vector<16x1xf32>
      %28 = arith.maximumf %26, %27 : vector<16x1xf32>
      %29 = math.sqrt %28 : vector<16x1xf32>
      %cst_16 = arith.constant 9.99999997E-7 : f32
      %30 = vector.broadcast %cst_16 : f32 to vector<16x1xf32>
      %31 = arith.addf %29, %30 : vector<16x1xf32>
      %32 = tpu.reciprocal %31 {approx = true} : vector<16x1xf32> -> vector<16x1xf32>
      %c0_17 = arith.constant 0 : index
      %c0_18 = arith.constant 0 : index
      %33 = vector.load %arg4[%c0_17, %c0_18] : memref<1x256xf32, #tpu.memory_space<vmem>>, vector<1x256xf32>
      %34 = vector.broadcast %22 : vector<16x1xf32> to vector<16x256xf32>
      %35 = arith.subf %15, %34 : vector<16x256xf32>
      %36 = vector.broadcast %32 : vector<16x1xf32> to vector<16x256xf32>
      %37 = arith.mulf %35, %36 : vector<16x256xf32>
      %38 = vector.broadcast %33 : vector<1x256xf32> to vector<16x256xf32>
      %39 = arith.mulf %38, %37 : vector<16x256xf32>
      %c0_19 = arith.constant 0 : index
      %c0_20 = arith.constant 0 : index
      %40 = vector.load %arg5[%c0_19, %c0_20] : memref<1x256xf32, #tpu.memory_space<vmem>>, vector<1x256xf32>
      %41 = vector.broadcast %40 : vector<1x256xf32> to vector<16x256xf32>
      %42 = arith.addf %39, %41 : vector<16x256xf32>
      %43 = arith.truncf %42 : vector<16x256xf32> to vector<16x256xbf16>
      %c0_21 = arith.constant 0 : index
      %c0_22 = arith.constant 0 : index
      %44 = vector.load %arg9[%c0_21, %c0_22] : memref<16x256xbf16, #tpu.memory_space<vmem>>, vector<16x256xbf16>
      tpu.vector_store %arg9[%c0_21, %c0_22], %43 {strides = array<i32>} : memref<16x256xbf16, #tpu.memory_space<vmem>>, vector<16x256xbf16>,
    } else {
    }
    %c0 = arith.constant 0 : index
    %c0_1 = arith.constant 0 : index
    %3 = vector.load %arg9[%c0, %c0_1] : memref<16x256xbf16, #tpu.memory_space<vmem>>, vector<16x256xbf16>
    %c0_2 = arith.constant 0 : index
    %c0_3 = arith.constant 0 : index
    %4 = vector.load %arg6[%c0_2, %c0_3] : memref<256x128xbf16, #tpu.memory_space<vmem>>, vector<256x128xbf16>
    %cst = arith.constant dense<0.000000e+00> : vector<16x128xf32>
    %5 = tpu.matmul %3, %4, %cst {dimension_numbers = #tpu.dot_dimension_numbers<[1], [0], [0], [1], [0, 0, 1, 1], [], []>} : vector<16x256xbf16>, vector<256x128xbf16>, vector<16x128xf32> -> vector<16x128xf32>
    %c0_4 = arith.constant 0 : index
    %c0_5 = arith.constant 0 : index
    %6 = vector.load %arg7[%c0_4, %c0_5] : memref<1x128xf32, #tpu.memory_space<vmem>>, vector<1x128xf32>
    %7 = vector.broadcast %6 : vector<1x128xf32> to vector<16x128xf32>
    %8 = arith.addf %5, %7 : vector<16x128xf32>
    %c128_i32 = arith.constant 128 : i32
    %9 = arith.muli %arg1, %c128_i32 : i32
    %10 = tpu.assume_multiple %9, 128 : i32
    %c0_6 = arith.constant 0 : index
    %11 = arith.index_cast %10 : i32 to index
    %12 = vector.load %arg3[%c0_6, %11] : memref<16x256xf32, #tpu.memory_space<vmem>>, vector<16x128xf32>
    %13 = arith.addf %12, %8 : vector<16x128xf32>
    %c0_7 = arith.constant 0 : index
    %c0_8 = arith.constant 0 : index
    %14 = vector.load %arg8[%c0_7, %c0_8] : memref<16x128xf32, #tpu.memory_space<vmem>>, vector<16x128xf32>
    tpu.vector_store %arg8[%c0_7, %c0_8], %13 {strides = array<i32>} : memref<16x128xf32, #tpu.memory_space<vmem>>, vector<16x128xf32>,
    return
  }
  func.func @transform_0(%arg0: i32, %arg1: i32, %arg2: memref<1xi32, #tpu.memory_space<smem>>) -> (i32, i32) {
    %c0_i32 = arith.constant 0 : i32
    %c0_i32_0 = arith.constant 0 : i32
    return %arg0, %c0_i32 : i32, i32
  }
  func.func @transform_1(%arg0: i32, %arg1: i32, %arg2: memref<1xi32, #tpu.memory_space<smem>>) -> (i32, i32) {
    %c0_i32 = arith.constant 0 : i32
    %c0_i32_0 = arith.constant 0 : i32
    %c0_i32_1 = arith.constant 0 : i32
    return %c0_i32, %c0_i32_0 : i32, i32
  }
  func.func @transform_2(%arg0: i32, %arg1: i32, %arg2: memref<1xi32, #tpu.memory_space<smem>>) -> (i32, i32) {
    %c0_i32 = arith.constant 0 : i32
    %c0_i32_0 = arith.constant 0 : i32
    %c0_i32_1 = arith.constant 0 : i32
    return %c0_i32, %c0_i32_0 : i32, i32
  }
  func.func @transform_3(%arg0: i32, %arg1: i32, %arg2: memref<1xi32, #tpu.memory_space<smem>>) -> (i32, i32) {
    %c0_i32 = arith.constant 0 : i32
    %c0_i32_0 = arith.constant 0 : i32
    return %c0_i32, %arg1 : i32, i32
  }
  func.func @transform_4(%arg0: i32, %arg1: i32, %arg2: memref<1xi32, #tpu.memory_space<smem>>) -> (i32, i32) {
    %c0_i32 = arith.constant 0 : i32
    %c0_i32_0 = arith.constant 0 : i32
    return %c0_i32, %arg1 : i32, i32
  }
  func.func @transform_5(%arg0: i32, %arg1: i32, %arg2: memref<1xi32, #tpu.memory_space<smem>>) -> (i32, i32) {
    %c0_i32 = arith.constant 0 : i32
    return %arg0, %arg1 : i32, i32
  }
}

</mosaic_0001>

<llo_original>
// kernel: tpu_custom_call.1
$region0: #{tpu_custom_call.1}
  #allocation0 [shape = 'u32[]', space=smem, size = 0x4, offset = 0x4, fixed_abs, tag = 'smem constant byte address 0x4 - core index']
  #allocation1 [shape = 'u32[144,128]{1,0:T(1,128)}', space=vmem, size = 0x12000, scoped, tag = 'internal scratch']
  #allocation2 [shape = 'bf16[16,256]{1,0:T(16,128)(2,1)}', space=vmem, size = 0x2000, scoped, tag = 'scratch operand']
  #allocation3 [shape = 's32[1]{0}', space=sflag, size = 0x4, scoped, tag = 'scoped memory for tpu_custom_call.1']
  #allocation4 [shape = 's32[1]{0:T(128)S(6)}', space=smem, size = 0x200, scoped, tag = 'prefetched SMEM operand 0']
  %s0 = inlined_call_operand.<no memory space> [shape: s32[1], index: 0, kind: input, shape index: {}]
  %s1 = inlined_call_operand.hbm [shape: f32[32,256], index: 1, kind: input, shape index: {}]
  %s2 = inlined_call_operand.vmem [shape: f32[1,256], index: 2, kind: input, shape index: {}]
  %s3 = inlined_call_operand.vmem [shape: f32[1,256], index: 3, kind: input, shape index: {}]
  %s4 = inlined_call_operand.hbm [shape: bf16[256,256], index: 4, kind: input, shape index: {}]
  %s5 = inlined_call_operand.vmem [shape: f32[1,256], index: 5, kind: input, shape index: {}]
  %s6 = inlined_call_operand.hbm [shape: f32[32,256], index: 6, kind: output, shape index: {}]
  %s7 = sld [smem:[#allocation0]]
  $region65: #{tpu_custom_call.1} parent=0
    _
  %s9 = ssub.s32 1, %s7
  %s10 = scalar_select 0, %s9, %s7
  %11 = sst [smem:[#allocation4]] %s0
  $region1: #{tpu_custom_call.1} parent=0
    #allocation5 [shape = 'u8[32768]{0}', space=vmem, size = 0x8000, scoped, tag = 'input window, operand 1']
    #allocation6 [shape = 's32[2]{0}', space=sflag, size = 0x8, scoped, tag = 'scoped memory for tpu_custom_call.1']
    #allocation7 [shape = 's32[2]{0}', space=sflag, size = 0x8, scoped, tag = 'scoped memory for tpu_custom_call.1']
    #allocation8 [shape = 'u8[131072]{0}', space=vmem, size = 0x20000, scoped, tag = 'input window, operand 4']
    #allocation9 [shape = 's32[2]{0}', space=sflag, size = 0x8, scoped, tag = 'scoped memory for tpu_custom_call.1']
    #allocation10 [shape = 'u8[16384]{0}', space=vmem, size = 0x4000, scoped, tag = 'output window, operand 0']
    %12 = vsyncpa [#allocation6], 0
    %s13 = scalar_lea.sflag [#allocation6], 1
    %14 = vsyncpa %s13, 0
    %15 = vsyncpa [#allocation9], 0
    %s16 = scalar_lea.sflag [#allocation9], 1
    %17 = vsyncpa %s16, 0
    %18 = vsyncpa [#allocation7], 0
    %s19 = scalar_lea.sflag [#allocation7], 1
    %20 = vsyncpa %s19, 0
    loop: start=0, step=1, limit=6
    $region2: #{tpu_custom_call.1} parent=1 // loop_pre_header
      _
    $region3: #{tpu_custom_call.1} parent=1 // loop_header
      %s22 = sphi 0, %s26
      %p23 = scmp.ge.s32.totalorder %s22, 6
      %s29 = sphi 0, %s41
      %s30 = sphi 0, %s37
      %s31 = sphi 0, %s29
      %s32 = sphi 0, %s30
      %s33 = sphi 0, %s31
      %s34 = sphi 0, %s32
      %s44 = sphi 0, %s46
      %s47 = sphi 0, %s44
      %s48 = sphi 0, %s47
      %s64 = sphi 0, %s48
      %s68 = sphi 0, %s68
      %s70 = sphi 0, %s68
      %s71 = sphi 0, %s70
      %s85 = sphi 0, %s71
      %s89 = sphi 0, %s89
      %s91 = sphi 0, %s89
      %s92 = sphi 0, %s91
      %s106 = sphi 0, %s92
      %s112 = sphi 0, %s114
      %s115 = sphi 0, %s112
      %s116 = sphi 0, %s115
      %s132 = sphi 0, %s116
      %s138 = sphi 0, %s140
      %s141 = sphi 0, %s138
      %s142 = sphi 0, %s141
      %s158 = sphi 0, %s142
      %s166 = sphi 0, %s168
      %s169 = sphi 0, %s166
      %s170 = sphi 0, %s169
      %s186 = sphi 0, %s170
    $region4: #{tpu_custom_call.1} parent=1 // loop_header_branch
      %25 = sbr.rel (%p23) target = $region8
    $region5: #{tpu_custom_call.1} parent=1 // loop_body
      %s27 = ssub.s32 %s22, 1
      %s28 = ssub.s32 %s22, 2
      %s35 = sadd.s32 1, %s30
      %p36 = scmp.ge.s32.totalorder %s35, 2
      %s37 = scalar_select %p36, 0, %s35
      %s38 = sadd.s32 1, %s29
      %s39 = scalar_select %p36, %s38, %s29
      %p40 = scmp.ge.s32.totalorder %s39, 2
      %s41 = scalar_select %p40, 0, %s39
      %s42 = ssub.s32 %s29, %s41
      %p43 = scmp.eq.s32.totalorder %s42, 0
      %s45 = sadd.s32 %s44, 1
      %s46 = scalar_select %p43, %s44, %s45
      %p49 = pneg %p43
      %p50 = scmp.eq.s32.totalorder %s22, 3
      %p51 = por %p49, %p50
      %p52 = scmp.ne.s32.totalorder %s44, %s47
      %p53 = scmp.eq.s32.totalorder %s22, 0
      %p54 = por %p52, %p53
      %p55 = scmp.ne.s32.totalorder %s44, %s47
      %p56 = scmp.eq.s32.totalorder %s27, 3
      %p57 = por %p55, %p56
      %p58 = scmp.ne.s32.totalorder %s47, %s48
      %p59 = scmp.eq.s32.totalorder %s27, 0
      %p60 = por %p58, %p59
      %p61 = scmp.ne.s32.totalorder %s47, %s48
      %p62 = scmp.eq.s32.totalorder %s28, 3
      %p63 = por %p61, %p62
      %p65 = scmp.ne.s32.totalorder %s48, %s64
      %p66 = scmp.eq.s32.totalorder %s28, 0
      %p67 = por %p65, %p66
      %s69 = sadd.s32 %s68, 1
      %p72 = scmp.eq.s32.totalorder %s22, 3
      %p73 = scmp.ne.s32.totalorder %s68, %s70
      %p74 = scmp.eq.s32.totalorder %s22, 0
      %p75 = por %p73, %p74
      %p76 = scmp.ne.s32.totalorder %s68, %s70
      %p77 = scmp.eq.s32.totalorder %s27, 3
      %p78 = por %p76, %p77
      %p79 = scmp.ne.s32.totalorder %s70, %s71
      %p80 = scmp.eq.s32.totalorder %s27, 0
      %p81 = por %p79, %p80
      %p82 = scmp.ne.s32.totalorder %s70, %s71
      %p83 = scmp.eq.s32.totalorder %s28, 3
      %p84 = por %p82, %p83
      %p86 = scmp.ne.s32.totalorder %s71, %s85
      %p87 = scmp.eq.s32.totalorder %s28, 0
      %p88 = por %p86, %p87
      %s90 = sadd.s32 %s89, 1
      %p93 = scmp.eq.s32.totalorder %s22, 3
      %p94 = scmp.ne.s32.totalorder %s89, %s91
      %p95 = scmp.eq.s32.totalorder %s22, 0
      %p96 = por %p94, %p95
      %p97 = scmp.ne.s32.totalorder %s89, %s91
      %p98 = scmp.eq.s32.totalorder %s27, 3
      %p99 = por %p97, %p98
      %p100 = scmp.ne.s32.totalorder %s91, %s92
      %p101 = scmp.eq.s32.totalorder %s27, 0
      %p102 = por %p100, %p101
      %p103 = scmp.ne.s32.totalorder %s91, %s92
      %p104 = scmp.eq.s32.totalorder %s28, 3
      %p105 = por %p103, %p104
      %p107 = scmp.ne.s32.totalorder %s92, %s106
      %p108 = scmp.eq.s32.totalorder %s28, 0
      %p109 = por %p107, %p108
      %s110 = ssub.s32 %s30, %s37
      %p111 = scmp.eq.s32.totalorder %s110, 0
      %s113 = sadd.s32 %s112, 1
      %s114 = scalar_select %p111, %s112, %s113
      %p117 = pneg %p111
      %p118 = scmp.eq.s32.totalorder %s22, 3
      %p119 = por %p117, %p118
      %p120 = scmp.ne.s32.totalorder %s112, %s115
      %p121 = scmp.eq.s32.totalorder %s22, 0
      %p122 = por %p120, %p121
      %p123 = scmp.ne.s32.totalorder %s112, %s115
      %p124 = scmp.eq.s32.totalorder %s27, 3
      %p125 = por %p123, %p124
      %p126 = scmp.ne.s32.totalorder %s115, %s116
      %p127 = scmp.eq.s32.totalorder %s27, 0
      %p128 = por %p126, %p127
      %p129 = scmp.ne.s32.totalorder %s115, %s116
      %p130 = scmp.eq.s32.totalorder %s28, 3
      %p131 = por %p129, %p130
      %p133 = scmp.ne.s32.totalorder %s116, %s132
      %p134 = scmp.eq.s32.totalorder %s28, 0
      %p135 = por %p133, %p134
      %s136 = ssub.s32 %s30, %s37
      %p137 = scmp.eq.s32.totalorder %s136, 0
      %s139 = sadd.s32 %s138, 1
      %s140 = scalar_select %p137, %s138, %s139
      %p143 = pneg %p137
      %p144 = scmp.eq.s32.totalorder %s22, 3
      %p145 = por %p143, %p144
      %p146 = scmp.ne.s32.totalorder %s138, %s141
      %p147 = scmp.eq.s32.totalorder %s22, 0
      %p148 = por %p146, %p147
      %p149 = scmp.ne.s32.totalorder %s138, %s141
      %p150 = scmp.eq.s32.totalorder %s27, 3
      %p151 = por %p149, %p150
      %p152 = scmp.ne.s32.totalorder %s141, %s142
      %p153 = scmp.eq.s32.totalorder %s27, 0
      %p154 = por %p152, %p153
      %p155 = scmp.ne.s32.totalorder %s141, %s142
      %p156 = scmp.eq.s32.totalorder %s28, 3
      %p157 = por %p155, %p156
      %p159 = scmp.ne.s32.totalorder %s142, %s158
      %p160 = scmp.eq.s32.totalorder %s28, 0
      %p161 = por %p159, %p160
      %s162 = ssub.s32 %s29, %s41
      %s163 = ssub.s32 %s30, %s37
      %s164 = sor.u32 %s162, %s163
      %p165 = scmp.eq.s32.totalorder %s164, 0
      %s167 = sadd.s32 %s166, 1
      %s168 = scalar_select %p165, %s166, %s167
      %p171 = pneg %p165
      %p172 = scmp.eq.s32.totalorder %s22, 3
      %p173 = por %p171, %p172
      %p174 = scmp.ne.s32.totalorder %s166, %s169
      %p175 = scmp.eq.s32.totalorder %s22, 0
      %p176 = por %p174, %p175
      %p177 = scmp.ne.s32.totalorder %s166, %s169
      %p178 = scmp.eq.s32.totalorder %s27, 3
      %p179 = por %p177, %p178
      %p180 = scmp.ne.s32.totalorder %s169, %s170
      %p181 = scmp.eq.s32.totalorder %s27, 0
      %p182 = por %p180, %p181
      %p183 = scmp.ne.s32.totalorder %s169, %s170
      %p184 = scmp.eq.s32.totalorder %s28, 3
      %p185 = por %p183, %p184
      %p187 = scmp.ne.s32.totalorder %s170, %s186
      %p188 = scmp.eq.s32.totalorder %s28, 0
      %p189 = por %p187, %p188
      %p190 = scmp.le.s32.totalorder 1, %s22
      %p191 = scmp.lt.s32.totalorder %s22, 5
      %p192 = pnand %p190, %p191
      %p193 = pneg %p192
      // Predicated region
      $region9: #{tpu_custom_call.1} parent=5 // pred_check
        _
      $region10: #{tpu_custom_call.1} parent=5 // pred_check_branch
        %195 = sbr.rel (%p192) target = $region12
      $region11: #{tpu_custom_call.1} parent=5 // pred_region
        %s196 = ssub.s32 %s22, 1
        // Predicated region
        $region13: #{tpu_custom_call.1} parent=11 // pred_check
          %p197 = pneg %p81
        $region14: #{tpu_custom_call.1} parent=11 // pred_check_branch
          %199 = sbr.rel (%p197) target = $region16
        $region15: #{tpu_custom_call.1} parent=11 // pred_region
          _
        $region16: #{tpu_custom_call.1} parent=11 // pred_fallthru
          _
        // Predicated region
        $region17: #{tpu_custom_call.1} parent=11 // pred_check
          %p200 = pneg %p102
        $region18: #{tpu_custom_call.1} parent=11 // pred_check_branch
          %202 = sbr.rel (%p200) target = $region20
        $region19: #{tpu_custom_call.1} parent=11 // pred_region
          _
        $region20: #{tpu_custom_call.1} parent=11 // pred_fallthru
          _
      $region12: #{tpu_custom_call.1} parent=5 // pred_fallthru
        _
      %p203 = scmp.lt.s32.totalorder %s22, 4
      // Predicated region
      $region21: #{tpu_custom_call.1} parent=5 // pred_check
        %p204 = pneg %p203
      $region22: #{tpu_custom_call.1} parent=5 // pred_check_branch
        %206 = sbr.rel (%p204) target = $region24
      $region23: #{tpu_custom_call.1} parent=5 // pred_region
        // Predicated region
        $region25: #{tpu_custom_call.1} parent=23 // pred_check
          %p207 = pneg %p54
        $region26: #{tpu_custom_call.1} parent=23 // pred_check_branch
          %209 = sbr.rel (%p207) target = $region28
        $region27: #{tpu_custom_call.1} parent=23 // pred_region
          %s210 = sand.u32 %s44, 1
          %s211 = scalar_lea.sflag [#allocation6], %s210
          %s212 = sand.u32 %s44, 1
          %s213 = smul.addr %s212, 32
          %s214 = scalar_lea.vmem [#allocation5], %s213
          %s215 = smul.u32 2, %s29
          %s217 = ssub.s32 512, 512
          %218 = vsyncadd %s211, %s217
          %s219 = smul.addr %s215, 2
          %s220 = smul.addr %s219, 128
          %s221 = scalar_lea.hbm %s1, %s220
          %s222 = sshll.u32 %s214, 4
          %s223 = int_to_ptr.vmem [resolvable:$true] %s222
          %228 = dma.hbm_to_vmem [thread:$0]  %s221, 512, %s223, %s211, 256, 256, 16
        $region28: #{tpu_custom_call.1} parent=23 // pred_fallthru
          _
        // Predicated region
        $region29: #{tpu_custom_call.1} parent=23 // pred_check
          %p229 = pneg %p122
        $region30: #{tpu_custom_call.1} parent=23 // pred_check_branch
          %231 = sbr.rel (%p229) target = $region32
        $region31: #{tpu_custom_call.1} parent=23 // pred_region
          %s232 = sand.u32 %s112, 1
          %s233 = scalar_lea.sflag [#allocation9], %s232
          %s234 = sand.u32 %s112, 1
          %s235 = smul.addr %s234, 128
          %s236 = scalar_lea.vmem [#allocation8], %s235
          %s238 = ssub.s32 2048, 2048
          %239 = vsyncadd %s233, %s238
          %s240 = smul.addr %s30, 64
          %s241 = scalar_lea.hbm %s4, %s240
          %s242 = sshll.u32 %s236, 4
          %s243 = int_to_ptr.vmem [resolvable:$true] %s242
          %248 = dma.hbm_to_vmem [thread:$0]  %s241, 2048, %s243, %s233, 128, 64, 4
        $region32: #{tpu_custom_call.1} parent=23 // pred_fallthru
          _
        // Predicated region
        $region33: #{tpu_custom_call.1} parent=23 // pred_check
          %p249 = pneg %p148
        $region34: #{tpu_custom_call.1} parent=23 // pred_check_branch
          %251 = sbr.rel (%p249) target = $region36
        $region35: #{tpu_custom_call.1} parent=23 // pred_region
          %p252 = scmp.lt.s32.totalorder %s30, 1
          %s253 = scalar_select %p252, %s30, 1
          %s254 = scalar_lea.vmem %s5, %s253
        $region36: #{tpu_custom_call.1} parent=23 // pred_fallthru
          _
      $region24: #{tpu_custom_call.1} parent=5 // pred_fallthru
        _
      %p255 = scmp.le.s32.totalorder 1, %s22
      %p256 = scmp.lt.s32.totalorder %s22, 5
      %p257 = pnand %p255, %p256
      %p258 = pneg %p257
      // Predicated region
      $region37: #{tpu_custom_call.1} parent=5 // pred_check
        _
      $region38: #{tpu_custom_call.1} parent=5 // pred_check_branch
        %260 = sbr.rel (%p257) target = $region40
      $region39: #{tpu_custom_call.1} parent=5 // pred_region
        %s261 = ssub.s32 %s22, 1
        %s262 = sand.u32 %s47, 1
        %s263 = scalar_lea.sflag [#allocation6], %s262
        %s264 = sand.u32 %s47, 1
        %s265 = smul.addr %s264, 32
        %s266 = scalar_lea.vmem [#allocation5], %s265
        // Predicated region
        $region41: #{tpu_custom_call.1} parent=39 // pred_check
          %p267 = pneg %p60
        $region42: #{tpu_custom_call.1} parent=39 // pred_check_branch
          %269 = sbr.rel (%p267) target = $region44
        $region43: #{tpu_custom_call.1} parent=39 // pred_region
          %270 = dma.done %s263, 512
        $region44: #{tpu_custom_call.1} parent=39 // pred_fallthru
          _
        %s271 = sand.u32 %s115, 1
        %s272 = scalar_lea.sflag [#allocation9], %s271
        %s273 = sand.u32 %s115, 1
        %s274 = smul.addr %s273, 128
        %s275 = scalar_lea.vmem [#allocation8], %s274
        // Predicated region
        $region45: #{tpu_custom_call.1} parent=39 // pred_check
          %p276 = pneg %p128
        $region46: #{tpu_custom_call.1} parent=39 // pred_check_branch
          %278 = sbr.rel (%p276) target = $region48
        $region47: #{tpu_custom_call.1} parent=39 // pred_region
          %279 = dma.done %s272, 2048
        $region48: #{tpu_custom_call.1} parent=39 // pred_fallthru
          _
        %s280 = sand.u32 %s47, 1
        %s281 = scalar_lea.sflag [#allocation6], %s280
        %s282 = sand.u32 %s47, 1
        %s283 = smul.addr %s282, 32
        %s284 = scalar_lea.vmem [#allocation5], %s283
        %p285 = pneg %p60
        %p286 = pneg %p57
        %p287 = pneg %p81
        %p288 = pneg %p78
        %p289 = pneg %p102
        %p290 = pneg %p99
        %s291 = sand.u32 %s115, 1
        %s292 = scalar_lea.sflag [#allocation9], %s291
        %s293 = sand.u32 %s115, 1
        %s294 = smul.addr %s293, 128
        %s295 = scalar_lea.vmem [#allocation8], %s294
        %p296 = pneg %p128
        %p297 = pneg %p125
        %p298 = scmp.lt.s32.totalorder %s32, 1
        %s299 = scalar_select %p298, %s32, 1
        %s300 = scalar_lea.vmem %s5, %s299
        %p301 = pneg %p154
        %p302 = pneg %p151
        %p303 = pneg %p182
        %p304 = pneg %p179
        %s305 = sand.u32 %s169, 1
        %s306 = scalar_lea.sflag [#allocation7], %s305
        %s307 = sand.u32 %s169, 1
        %s308 = smul.addr %s307, 16
        %s309 = scalar_lea.vmem [#allocation10], %s308
        %s310 = smul.u32 2, %s31
        %p311 = scmp.lt.s32.totalorder %s32, 1
        %s312 = scalar_select %p311, %s32, 1
        %s313 = scalar_lea.vmem %s5, %s312
        %s314 = smul.u32 2, %s31
        %p316 = scmp.eq.s32.totalorder %s32, 0
        // Predicated region
        $region49: #{tpu_custom_call.1} parent=39 // pred_check
          %p317 = pneg %p316
        $region50: #{tpu_custom_call.1} parent=39 // pred_check_branch
          %319 = sbr.rel (%p317) target = $region52
        $region51: #{tpu_custom_call.1} parent=39 // pred_region
          %v320 = vld [vmem:[%s266] sm:$0xff]
          %v321 = vld [vmem:[%s266 + $0x8] sm:$0xff]
          %v322 = vld [vmem:[%s266 + $0x10] sm:$0xff]
          %v323 = vld [vmem:[%s266 + $0x18] sm:$0xff]
          %v324 = vadd.f32 %v320, %v321
          %325 = vadd.xlane.f32.xlu0 %v324
          %v326 = vpop.xlane.xlu0 %325
          %v327 = vadd.f32 %v322, %v323
          %328 = vadd.xlane.f32.xlu0 %v327
          %v329 = vpop.xlane.xlu0 %328
          %v330 = vmul.f32 %v320, %v320
          %v331 = vmul.f32 %v321, %v321
          %v332 = vmul.f32 %v322, %v322
          %v333 = vmul.f32 %v323, %v323
          %v334 = vadd.f32 %v330, %v331
          %335 = vadd.xlane.f32.xlu0 %v334
          %v336 = vpop.xlane.xlu0 %335
          %v337 = vadd.f32 %v332, %v333
          %338 = vadd.xlane.f32.xlu0 %v337
          %v339 = vpop.xlane.xlu0 %338
          %v340 = vmul.f32 %v326, 0.00390625
          %v341 = vmul.f32 %v329, 0.00390625
          %v342 = vmul.f32 %v326, %v340
          %v343 = vmul.f32 %v329, %v341
          %v344 = vsub.f32 %v336, %v342
          %v345 = vsub.f32 %v339, %v343
          %v346 = vmul.f32 %v344, 0.003921569
          %v347 = vmul.f32 %v345, 0.003921569
          %v348 = vmax.f32 %v346, 0.0
          %v349 = vmax.f32 %v347, 0.0
          %v350 = vrsqrt.pop %v348
          %v351 = vmul.f32 %v348, %v350
          %vm352 = vcmp.eq.f32.partialorder %v348, inf
          %v353 = vsel %vm352, %v348, %v351
          %vm354 = vcmp.eq.f32.partialorder %v348, 0.0
          %v355 = vand.u32 %v348, 2147483648
          %v356 = vsel %vm354, %v355, %v353
          %v357 = vrsqrt.pop %v349
          %v358 = vmul.f32 %v349, %v357
          %vm359 = vcmp.eq.f32.partialorder %v349, inf
          %v360 = vsel %vm359, %v349, %v358
          %vm361 = vcmp.eq.f32.partialorder %v349, 0.0
          %v362 = vand.u32 %v349, 2147483648
          %v363 = vsel %vm361, %v362, %v360
          %v364 = vadd.f32 %v356, 1e-06
          %v365 = vadd.f32 %v363, 1e-06
          %v366 = vrcp.pop %v364
          %v367 = vrcp.pop %v365
          %v368 = vld [vmem:[%s2] sm:$0x3]
          %v369 = vsub.f32 %v320, %v340
          %v370 = vsub.f32 %v321, %v340
          %v371 = vsub.f32 %v322, %v341
          %v372 = vsub.f32 %v323, %v341
          %v373 = vmul.f32 %v369, %v366
          %v374 = vmul.f32 %v370, %v366
          %v375 = vmul.f32 %v371, %v367
          %v376 = vmul.f32 %v372, %v367
          %v378 = vlaneseq
          %v379 = vshrl.u32 %v378, 7
          %v380 = vsub.s32 0, %v379
          %v381 = vrot.slane %v368, %v380
          %v382 = vlaneseq
          %v383 = vshrl.u32 %v382, 7
          %v384 = vsub.s32 1, %v383
          %v385 = vrot.slane %v368, %v384
          %v388 = vmul.f32 %v381, %v373
          %v389 = vmul.f32 %v385, %v374
          %v390 = vmul.f32 %v381, %v375
          %v391 = vmul.f32 %v385, %v376
          %v392 = vld [vmem:[%s3] sm:$0x3]
          %v394 = vlaneseq
          %v395 = vshrl.u32 %v394, 7
          %v396 = vsub.s32 0, %v395
          %v397 = vrot.slane %v392, %v396
          %v398 = vlaneseq
          %v399 = vshrl.u32 %v398, 7
          %v400 = vsub.s32 1, %v399
          %v401 = vrot.slane %v392, %v400
          %v404 = vadd.f32 %v388, %v397
          %v405 = vadd.f32 %v389, %v401
          %v406 = vadd.f32 %v390, %v397
          %v407 = vadd.f32 %v391, %v401
          %v408 = vpack.c.bf16 %v406, %v404
          %v409 = vpack.c.bf16 %v407, %v405
          %410 = vst [vmem:[#allocation2] sm:$0xff] %v408
          %411 = vst [vmem:[#allocation2 + $0x8] sm:$0xff] %v409
        $region52: #{tpu_custom_call.1} parent=39 // pred_fallthru
          _
        %v412 = vld [vmem:[#allocation2] sm:$0xff]
        %v413 = vld [vmem:[#allocation2 + $0x8] sm:$0xff]
        %v414 = vld [vmem:[%s275] sm:$0xf]
        %v415 = vld [vmem:[%s275 + $0x4] sm:$0xf]
        %v416 = vld [vmem:[%s275 + $0x8] sm:$0xf]
        %v417 = vld [vmem:[%s275 + $0xc] sm:$0xf]
        %v418 = vld [vmem:[%s275 + $0x10] sm:$0xf]
        %v419 = vld [vmem:[%s275 + $0x14] sm:$0xf]
        %v420 = vld [vmem:[%s275 + $0x18] sm:$0xf]
        %v421 = vld [vmem:[%s275 + $0x1c] sm:$0xf]
        %v422 = vld [vmem:[%s275 + $0x20] sm:$0xf]
        %v423 = vld [vmem:[%s275 + $0x24] sm:$0xf]
        %v424 = vld [vmem:[%s275 + $0x28] sm:$0xf]
        %v425 = vld [vmem:[%s275 + $0x2c] sm:$0xf]
        %v426 = vld [vmem:[%s275 + $0x30] sm:$0xf]
        %v427 = vld [vmem:[%s275 + $0x34] sm:$0xf]
        %v428 = vld [vmem:[%s275 + $0x38] sm:$0xf]
        %v429 = vld [vmem:[%s275 + $0x3c] sm:$0xf]
        %v430 = vld [vmem:[%s275 + $0x40] sm:$0xf]
        %v431 = vld [vmem:[%s275 + $0x44] sm:$0xf]
        %v432 = vld [vmem:[%s275 + $0x48] sm:$0xf]
        %v433 = vld [vmem:[%s275 + $0x4c] sm:$0xf]
        %v434 = vld [vmem:[%s275 + $0x50] sm:$0xf]
        %v435 = vld [vmem:[%s275 + $0x54] sm:$0xf]
        %v436 = vld [vmem:[%s275 + $0x58] sm:$0xf]
        %v437 = vld [vmem:[%s275 + $0x5c] sm:$0xf]
        %v438 = vld [vmem:[%s275 + $0x60] sm:$0xf]
        %v439 = vld [vmem:[%s275 + $0x64] sm:$0xf]
        %v440 = vld [vmem:[%s275 + $0x68] sm:$0xf]
        %v441 = vld [vmem:[%s275 + $0x6c] sm:$0xf]
        %v442 = vld [vmem:[%s275 + $0x70] sm:$0xf]
        %v443 = vld [vmem:[%s275 + $0x74] sm:$0xf]
        %v444 = vld [vmem:[%s275 + $0x78] sm:$0xf]
        %v445 = vld [vmem:[%s275 + $0x7c] sm:$0xf]
        %v446 = vld [vmem:[%s313] sm:$0x1]
        %v448 = vlaneseq
        %v449 = vshrl.u32 %v448, 7
        %v450 = vsub.s32 0, %v449
        %v451 = vrot.slane %v446, %v450
        %v485 = vunpack.c.l.b16 %v414
        %v486 = vunpack.c.l.b16 %v415
        %v487 = vunpack.c.l.b16 %v416
        %v488 = vunpack.c.l.b16 %v417
        %v489 = vunpack.c.l.b16 %v418
        %v490 = vunpack.c.l.b16 %v419
        %v491 = vunpack.c.l.b16 %v420
        %v492 = vunpack.c.l.b16 %v421
        %v493 = vunpack.c.l.b16 %v422
        %v494 = vunpack.c.l.b16 %v423
        %v495 = vunpack.c.l.b16 %v424
        %v496 = vunpack.c.l.b16 %v425
        %v497 = vunpack.c.l.b16 %v426
        %v498 = vunpack.c.l.b16 %v427
        %v499 = vunpack.c.l.b16 %v428
        %v500 = vunpack.c.l.b16 %v429
        %v501 = vunpack.c.l.b16 %v430
        %v502 = vunpack.c.l.b16 %v431
        %v503 = vunpack.c.l.b16 %v432
        %v504 = vunpack.c.l.b16 %v433
        %v505 = vunpack.c.l.b16 %v434
        %v506 = vunpack.c.l.b16 %v435
        %v507 = vunpack.c.l.b16 %v436
        %v508 = vunpack.c.l.b16 %v437
        %v509 = vunpack.c.l.b16 %v438
        %v510 = vunpack.c.l.b16 %v439
        %v511 = vunpack.c.l.b16 %v440
        %v512 = vunpack.c.l.b16 %v441
        %v513 = vunpack.c.l.b16 %v442
        %v514 = vunpack.c.l.b16 %v443
        %v515 = vunpack.c.l.b16 %v444
        %v516 = vunpack.c.l.b16 %v445
        %v517 = vpack.c.b16 %v486, %v485
        %v518 = vpack.c.b16 %v488, %v487
        %v519 = vpack.c.b16 %v490, %v489
        %v520 = vpack.c.b16 %v492, %v491
        %v521 = vpack.c.b16 %v494, %v493
        %v522 = vpack.c.b16 %v496, %v495
        %v523 = vpack.c.b16 %v498, %v497
        %v524 = vpack.c.b16 %v500, %v499
        %v525 = vpack.c.b16 %v502, %v501
        %v526 = vpack.c.b16 %v504, %v503
        %v527 = vpack.c.b16 %v506, %v505
        %v528 = vpack.c.b16 %v508, %v507
        %v529 = vpack.c.b16 %v510, %v509
        %v530 = vpack.c.b16 %v512, %v511
        %v531 = vpack.c.b16 %v514, %v513
        %v532 = vpack.c.b16 %v516, %v515
        %549 = vmatprep.subr.bf16.mxu0 0
        %550 = vmatpush1.bf16.msra.mxu0 %v517
        %551 = vmatprep.subr.bf16.mxu0 0
        %552 = vmatpush1.bf16.msra.mxu0 %v518
        %553 = vmatprep.subr.bf16.mxu0 0
        %554 = vmatpush1.bf16.msra.mxu0 %v519
        %555 = vmatprep.subr.bf16.mxu0 0
        %556 = vmatpush1.bf16.msra.mxu0 %v520
        %557 = vmatprep.subr.bf16.mxu0 0
        %558 = vmatpush1.bf16.msra.mxu0 %v521
        %559 = vmatprep.subr.bf16.mxu0 0
        %560 = vmatpush1.bf16.msra.mxu0 %v522
        %561 = vmatprep.subr.bf16.mxu0 0
        %562 = vmatpush1.bf16.msra.mxu0 %v523
        %563 = vmatprep.subr.bf16.mxu0 0
        %564 = vmatpush1.bf16.msra.mxu0 %v524
        %565 = vmatprep.subr.bf16.mxu0 0
        %566 = vmatpush1.bf16.msra.mxu0 %v525
        %567 = vmatprep.subr.bf16.mxu0 0
        %568 = vmatpush1.bf16.msra.mxu0 %v526
        %569 = vmatprep.subr.bf16.mxu0 0
        %570 = vmatpush1.bf16.msra.mxu0 %v527
        %571 = vmatprep.subr.bf16.mxu0 0
        %572 = vmatpush1.bf16.msra.mxu0 %v528
        %573 = vmatprep.subr.bf16.mxu0 0
        %574 = vmatpush1.bf16.msra.mxu0 %v529
        %575 = vmatprep.subr.bf16.mxu0 0
        %576 = vmatpush1.bf16.msra.mxu0 %v530
        %577 = vmatprep.subr.bf16.mxu0 0
        %578 = vmatpush1.bf16.msra.mxu0 %v531
        %579 = vmatprep.subr.bf16.mxu0 0
        %580 = vmatpush1.bf16.msra.mxu0 %v532
        %581 = vmatprep.mubr.bf16.mxu0 %v413
        %582 = vmatmul.mubr.bf16.gmra.mrb[0].mxu0 %v412
        %v583 = vpop.f32.mrb[0].mxu0
        %v584 = vadd.f32 %v451, %v583
        %v585 = vpop.f32.mrb[0].mxu0
        %v586 = vpop.f32.mrb[0].mxu0
        %v587 = vadd.f32 %v451, %v586
        %v588 = vpop.f32.mrb[0].mxu0
        %589 = vdwg.mxu0
        %s590 = smul.u32 %s32, 128
        %s591 = sshra.s32 %s590, 7
        %s592 = sand.u32 %s590, 127
        %s593 = smul.addr %s591, 8
        %s594 = scalar_lea.vmem %s266, %s593 [#allocation5]
        %v595 = vld [vmem:[%s594] sm:$0xff]
        %v596 = vld [vmem:[%s594 + $0x10] sm:$0xff]
        %v597 = vadd.f32 %v595, %v584
        %v598 = vadd.f32 %v596, %v587
        %599 = vst [vmem:[%s309] sm:$0xff] %v597
        %600 = vst [vmem:[%s309 + $0x8] sm:$0xff] %v598
        %s601 = sand.u32 %s169, 1
        %s602 = scalar_lea.sflag [#allocation7], %s601
        %s603 = sand.u32 %s169, 1
        %s604 = smul.addr %s603, 16
        %s605 = scalar_lea.vmem [#allocation10], %s604
        // Predicated region
        $region53: #{tpu_custom_call.1} parent=39 // pred_check
          %p606 = pneg %p179
        $region54: #{tpu_custom_call.1} parent=39 // pred_check_branch
          %608 = sbr.rel (%p606) target = $region56
        $region55: #{tpu_custom_call.1} parent=39 // pred_region
          %s609 = smul.u32 2, %s31
          %s611 = ssub.s32 256, 256
          %612 = vsyncadd %s602, %s611
          %s613 = smul.addr %s609, 2
          %s614 = sadd.s32 %s32, %s613
          %s615 = smul.addr %s614, 128
          %s616 = scalar_lea.hbm %s6, %s615
          %s617 = sshll.u32 %s605, 4
          %s618 = int_to_ptr.vmem [resolvable:$true] %s617
          %623 = dma.vmem_to_hbm [thread:$0]  %s618, 256, %s616, %s602, 128, 256, 8
        $region56: #{tpu_custom_call.1} parent=39 // pred_fallthru
          _
      $region40: #{tpu_custom_call.1} parent=5 // pred_fallthru
        _
      %p624 = scmp.le.s32.totalorder 2, %s22
      // Predicated region
      $region57: #{tpu_custom_call.1} parent=5 // pred_check
        %p625 = pneg %p624
      $region58: #{tpu_custom_call.1} parent=5 // pred_check_branch
        %627 = sbr.rel (%p625) target = $region60
      $region59: #{tpu_custom_call.1} parent=5 // pred_region
        %s628 = ssub.s32 %s22, 2
        // Predicated region
        $region61: #{tpu_custom_call.1} parent=59 // pred_check
          %p629 = pneg %p185
        $region62: #{tpu_custom_call.1} parent=59 // pred_check_branch
          %631 = sbr.rel (%p629) target = $region64
        $region63: #{tpu_custom_call.1} parent=59 // pred_region
          %s632 = sand.u32 %s170, 1
          %s633 = scalar_lea.sflag [#allocation7], %s632
          %s634 = sand.u32 %s170, 1
          %s635 = smul.addr %s634, 16
          %s636 = scalar_lea.vmem [#allocation10], %s635
          %637 = dma.done %s633, 256
        $region64: #{tpu_custom_call.1} parent=59 // pred_fallthru
          _
      $region60: #{tpu_custom_call.1} parent=5 // pred_fallthru
        _
    $region6: #{tpu_custom_call.1} parent=1 // loop_footer
      %s26 = sadd.s32 1, %s22
    $region7: #{tpu_custom_call.1} parent=1 // loop_footer_branch
      %21 = sbr.rel target = $region3
    $region8: #{tpu_custom_call.1} parent=1 // loop_exit
      _
    %638 = vsyncpa [#allocation6], 1
    %s639 = scalar_lea.sflag [#allocation6], 1
    %640 = vsyncpa %s639, 1
    %641 = vsyncpa [#allocation9], 1
    %s642 = scalar_lea.sflag [#allocation9], 1
    %643 = vsyncpa %s642, 1
    %644 = vsyncpa [#allocation7], 1
    %s645 = scalar_lea.sflag [#allocation7], 1
    %646 = vsyncpa %s645, 1

</llo_original>
